<compile_context>
chip_gen: v6e
topology: v6e:2x2x1
jax: 0.10.0
libtpu: 0.0.40
codegen_flags: <defaults>
</compile_context>

<pallas_src>
import jax
import jax.numpy as jnp
from jax.experimental import pallas as pl
from jax.experimental.pallas import tpu as pltpu

_LANE = 128
_MAX_LANE_WIDTH = 4096                     # widest slab last-dim we build
_TARGET_BLOCK_BYTES = 2 * 1024 * 1024      # per operand side; x2 ops x2 bufs ~ 8 MiB VMEM
_VMEM_LIMIT_BYTES = 32 * 1024 * 1024       # safe on v5e / v6e / v7x


def _copy_kernel(x_ref, o_ref):
    # Identity streaming copy of one (block_rows, cols) lane-dense block.
    o_ref[...] = x_ref[...]


def _resolve_size(size, total):
    """Resolve a single -1 in the requested view size (torch.view semantics)."""
    size = tuple(int(s) for s in size)
    if -1 in size:
        neg_idx = size.index(-1)
        known = 1
        for i, s in enumerate(size):
            if i != neg_idx:
                known *= s
        assert known > 0 and total % known == 0, \
            "view size is not compatible with input tensor's size"
        size = size[:neg_idx] + (total // known,) + size[neg_idx + 1:]
    prod = 1
    for s in size:
        prod *= s
    assert prod == total, "view size is not compatible with input tensor's size"
    return size


def _choose_slab(total, itemsize):
    """Factor `total` elements into a lane-dense (rows, cols) slab.

    cols is a multiple of 128 grown as wide as possible (<= _MAX_LANE_WIDTH)
    so stores are unmasked full-width and DMAs are few and fat; rows is kept
    at least one packed-vreg height tall whenever possible.
    """
    sublane = max(8, 32 // itemsize)       # 8 for f32, 16 for bf16, 32 for int8/fp8
    rows, cols = total // _LANE, _LANE
    while cols * 2 <= _MAX_LANE_WIDTH and rows % 2 == 0 and rows // 2 >= sublane:
        rows //= 2
        cols *= 2
    return rows, cols, sublane


def _pallas_copy_2d(x2d, block_rows):
    """Tiled identity copy of a lane-dense 2-D slab through VMEM."""
    rows, cols = x2d.shape
    nbytes = rows * cols * x2d.dtype.itemsize
    grid = (rows // block_rows,)
    return pl.pallas_call(
        _copy_kernel,
        out_shape=jax.ShapeDtypeStruct((rows, cols), x2d.dtype),
        grid=grid,
        in_specs=[pl.BlockSpec((block_rows, cols), lambda i: (i, 0))],
        out_specs=pl.BlockSpec((block_rows, cols), lambda i: (i, 0)),
        compiler_params=pltpu.CompilerParams(
            # Grid axis shards across the 2 TensorCores on v7x.
            dimension_semantics=("parallel",),
            vmem_limit_bytes=_VMEM_LIMIT_BYTES,
        ),
        cost_estimate=pl.CostEstimate(
            flops=0, transcendentals=0, bytes_accessed=2 * nbytes),
    )(x2d)


def _materialized_view(x, target):
    """Reshape + materialize into a fresh buffer via the Pallas copy kernel."""
    total = int(x.size)
    itemsize = x.dtype.itemsize

    # Ragged / empty sizes: no clean lane-dense tiling -> zero-copy reshape
    # (never build a single (1, total) block that can blow the VMEM limit).
    if total == 0 or total % _LANE != 0:
        return jnp.reshape(x, target)

    rows, cols, sublane = _choose_slab(total, itemsize)
    slab_bytes = total * itemsize
    row_bytes = cols * itemsize

    if slab_bytes <= _TARGET_BLOCK_BYTES:
        block_rows = rows                          # single full-array block
    elif rows % sublane == 0:
        block_rows = sublane
        while (rows % (block_rows * 2) == 0
               and block_rows * 2 * row_bytes <= _TARGET_BLOCK_BYTES):
            block_rows *= 2
    else:
        # Too big for one block and not cleanly tileable: stay zero-copy.
        return jnp.reshape(x, target)

    y2d = _pallas_copy_2d(jnp.reshape(x, (rows, cols)), block_rows)
    return jnp.reshape(y2d, target)


class View:
    """JAX/Pallas port of encoding.nn.View: reshape the input to `size`.

    Default path is a zero-copy jnp.reshape (exactly torch.view semantics for
    contiguous tensors: metadata only, no HBM traffic).  Pass
    ``materialize=True`` to copy the bytes into a fresh buffer through the
    optimized Pallas streaming-copy kernel.
    """

    def __init__(self, *args, materialize=False):
        if len(args) == 1 and isinstance(args[0], (tuple, list)):
            self.size = tuple(args[0])
        else:
            self.size = tuple(args)
        self.materialize = materialize

    def __call__(self, x):
        total = int(x.size)
        target = _resolve_size(self.size, total)
        if self.materialize:
            return _materialized_view(x, target)
        # TODO(synk): true shared-storage view aliasing has no JAX equivalent;
        # jnp.reshape is the zero-copy functional analogue.
        return jnp.reshape(x, target)


if __name__ == "__main__":
    key = jax.random.PRNGKey(0)
    x = jax.random.normal(key, (2, 4, 16, 16), dtype=jnp.float32)  # NCHW, 2048 elems
    ref = jnp.reshape(x, (2, 1024))

    # Default path: zero-copy reshape (metadata only), matching torch.view.
    y_fast = jax.block_until_ready(View(2, -1)(x))
    assert y_fast.shape == (2, 1024) and y_fast.dtype == x.dtype
    assert bool(jnp.all(y_fast == ref))

    # Pallas streaming-copy path: small tensor -> single full-array block.
    y = jax.block_until_ready(View(2, -1, materialize=True)(x))
    assert y.shape == (2, 1024) and y.dtype == x.dtype
    assert bool(jnp.all(y == ref))

    # 4-D target view through the kernel.
    y2 = jax.block_until_ready(View(4, 2, 16, 16, materialize=True)(x))
    assert y2.shape == (4, 2, 16, 16)
    assert bool(jnp.all(jnp.reshape(y2, (-1,)) == jnp.reshape(x, (-1,))))

    # Ragged element count (not a multiple of 128): safe zero-copy fallback.
    x3 = jax.random.normal(jax.random.PRNGKey(1), (3, 5, 7), dtype=jnp.float32)
    y3 = jax.block_until_ready(View(-1, materialize=True)(x3))
    assert y3.shape == (105,)
    assert bool(jnp.all(y3 == jnp.reshape(x3, (105,))))

    # Medium bf16 tensor: exercises the wide-lane slab (cols=4096), the
    # 16-row packed-sublane alignment and a multi-block grid (>1 step).
    x4 = jax.random.normal(jax.random.PRNGKey(2), (8, 64, 64, 64),
                           dtype=jnp.bfloat16)
    y4 = jax.block_until_ready(View(8, -1, materialize=True)(x4))
    assert y4.shape == (8, 64 * 64 * 64) and y4.dtype == x4.dtype
    assert bool(jnp.all(jnp.reshape(y4, (-1,)) == jnp.reshape(x4, (-1,))))

    print("KERNEL_OK")
</pallas_src>

<mosaic_0001>
module attributes {stable_mosaic.version = 11 : i64} {
  func.func @_copy_kernel(%arg0: i32, %arg1: memref<8x256xf32, #tpu.memory_space<vmem>>, %arg2: memref<8x256xf32, #tpu.memory_space<vmem>>) attributes {dimension_semantics = [#tpu.dimension_semantics<parallel>], iteration_bounds = array<i64: 1>, scalar_prefetch = 0 : i64, scratch_operands = 0 : i64, tpu.core_type = #tpu.core_type<tc>, window_params = [{transform_indices = @transform_0, window_bounds = array<i64: 8, 256>}, {transform_indices = @transform_1, window_bounds = array<i64: 8, 256>}]} {
    %c0 = arith.constant 0 : index
    %c0_0 = arith.constant 0 : index
    %0 = vector.load %arg1[%c0, %c0_0] : memref<8x256xf32, #tpu.memory_space<vmem>>, vector<8x256xf32>
    %c0_1 = arith.constant 0 : index
    %c0_2 = arith.constant 0 : index
    %1 = vector.load %arg2[%c0_1, %c0_2] : memref<8x256xf32, #tpu.memory_space<vmem>>, vector<8x256xf32>
    tpu.vector_store %arg2[%c0_1, %c0_2], %0 {strides = array<i32>} : memref<8x256xf32, #tpu.memory_space<vmem>>, vector<8x256xf32>,
    return
  }
  func.func @transform_0(%arg0: i32) -> (i32, i32) {
    %c0_i32 = arith.constant 0 : i32
    %c0_i32_0 = arith.constant 0 : i32
    return %arg0, %c0_i32 : i32, i32
  }
  func.func @transform_1(%arg0: i32) -> (i32, i32) {
    %c0_i32 = arith.constant 0 : i32
    %c0_i32_0 = arith.constant 0 : i32
    return %arg0, %c0_i32 : i32, i32
  }
}

</mosaic_0001>

<llo_original>
// kernel: tpu_custom_call.1
$region0: #{tpu_custom_call.1}
  #allocation0 [shape = 'u32[]', space=smem, size = 0x4, offset = 0x4, fixed_abs, tag = 'smem constant byte address 0x4 - core index']
  #allocation1 [shape = 'u32[144,128]{1,0:T(1,128)}', space=vmem, size = 0x12000, scoped, tag = 'internal scratch']
  %s0 = inlined_call_operand.hbm [shape: f32[8,256], index: 0, kind: input, shape index: {}]
  %s1 = inlined_call_operand.hbm [shape: f32[8,256], index: 1, kind: output, shape index: {}]
  %s2 = sld [smem:[#allocation0]]
  $region18: #{tpu_custom_call.1} parent=0
    _
  %s4 = ssub.s32 1, %s2
  %s5 = scalar_select 0, %s4, %s2
  $region1: #{tpu_custom_call.1} parent=0
    #allocation2 [shape = 'u8[8192]{0}', space=vmem, size = 0x2000, scoped, tag = 'input window, operand 0, single buffered']
    #allocation3 [shape = 's32[1]{0}', space=sflag, size = 0x4, scoped, tag = 'scoped memory for tpu_custom_call.1']
    #allocation4 [shape = 's32[1]{0}', space=sflag, size = 0x4, scoped, tag = 'scoped memory for tpu_custom_call.1']
    #allocation5 [shape = 'u8[8192]{0}', space=vmem, size = 0x2000, scoped, tag = 'output window, operand 0, single buffered']
    %6 = vsyncpa [#allocation3], 0
    %7 = vsyncpa [#allocation4], 0
    // Predicated region
    $region2: #{tpu_custom_call.1} parent=1 // pred_check
      _
    $region3: #{tpu_custom_call.1} parent=1 // pred_check_branch
      %9 = sbr.rel (0) target = $region5
    $region4: #{tpu_custom_call.1} parent=1 // pred_region
      %s11 = ssub.s32 256, 256
      %12 = vsyncadd [#allocation3], %s11
      %s14 = sshll.u32 [#allocation2], 4
      %s15 = int_to_ptr.vmem [resolvable:$true] %s14
      %17 = dma.hbm_to_vmem [thread:$0]  %s0, 256, %s15, [#allocation3]
    $region5: #{tpu_custom_call.1} parent=1 // pred_fallthru
      _
    // Predicated region
    $region6: #{tpu_custom_call.1} parent=1 // pred_check
      _
    $region7: #{tpu_custom_call.1} parent=1 // pred_check_branch
      %19 = sbr.rel (0) target = $region9
    $region8: #{tpu_custom_call.1} parent=1 // pred_region
      %20 = dma.done [#allocation3], 256
    $region9: #{tpu_custom_call.1} parent=1 // pred_fallthru
      _
    %v21 = vld [vmem:[#allocation2] sm:$0xff]
    %v22 = vld [vmem:[#allocation2 + $0x8] sm:$0xff]
    %23 = vst [vmem:[#allocation5] sm:$0xff] %v21
    %24 = vst [vmem:[#allocation5 + $0x8] sm:$0xff] %v22
    // Predicated region
    $region10: #{tpu_custom_call.1} parent=1 // pred_check
      _
    $region11: #{tpu_custom_call.1} parent=1 // pred_check_branch
      %26 = sbr.rel (0) target = $region13
    $region12: #{tpu_custom_call.1} parent=1 // pred_region
      %s28 = ssub.s32 256, 256
      %29 = vsyncadd [#allocation4], %s28
      %s31 = sshll.u32 [#allocation5], 4
      %s32 = int_to_ptr.vmem [resolvable:$true] %s31
      %34 = dma.vmem_to_hbm [thread:$0]  %s32, 256, %s1, [#allocation4]
    $region13: #{tpu_custom_call.1} parent=1 // pred_fallthru
      _
    // Predicated region
    $region14: #{tpu_custom_call.1} parent=1 // pred_check
      _
    $region15: #{tpu_custom_call.1} parent=1 // pred_check_branch
      %36 = sbr.rel (0) target = $region17
    $region16: #{tpu_custom_call.1} parent=1 // pred_region
      %37 = dma.done [#allocation4], 256
    $region17: #{tpu_custom_call.1} parent=1 // pred_fallthru
      _
    %38 = vsyncpa [#allocation3], 1
    %39 = vsyncpa [#allocation4], 1

</llo_original>
